<compile_context>
chip_gen: v5e
topology: v5e:2x2
jax: 0.10.0
libtpu: 0.0.40
codegen_flags: <defaults>
</compile_context>

<pallas_src>
import jax
import jax.numpy as jnp
from jax.experimental import pallas as pl
from jax.experimental.pallas import tpu as pltpu


def _mlp_kernel(x1_ref, x2_ref, w1a_ref, w1b_ref, b1_ref, w2_ref, b2_ref, o_ref):
    # Hidden layer: two K-chunk MXU matmuls replace torch.cat([x1, x2]) @ W1
    # (the concat never materializes in HBM).  f32 accumulation on the MXU;
    # bias-add + ReLU kept in f32 on the VPU (v5e-safe).
    h = jnp.dot(x1_ref[...], w1a_ref[...], preferred_element_type=jnp.float32)
    h = h + jnp.dot(x2_ref[...], w1b_ref[...], preferred_element_type=jnp.float32)
    h = jnp.maximum(h + b1_ref[...], 0.0)
    # Output layer: cast h back to the streaming dtype so the MXU stays on its
    # fast path (no-op on the f32 path); unpadded (TB, O) store.
    y = jnp.dot(h.astype(w2_ref.dtype), w2_ref[...],
                preferred_element_type=jnp.float32)
    o_ref[...] = (y + b2_ref[...]).astype(o_ref.dtype)


def pairs_fuse_forward(x1, x2, w1, b1, w2, b2, *, block_b=1024, compute_dtype=None):
    """x1: (B, D1), x2: (B, D2); w1: (D1+D2, H), b1: (H,); w2: (H, O), b2: (O,).

    compute_dtype=None streams the inputs in their own dtype (no extra HBM cast
    pass).  Pass jnp.bfloat16 for bf16 MXU streaming (f32 accumulation/epilogue).
    """
    B, D1 = x1.shape
    B2, D2 = x2.shape
    assert B == B2
    D = D1 + D2
    H = w1.shape[1]
    O = w2.shape[1]
    assert w1.shape[0] == D and w2.shape[0] == H

    if compute_dtype is None:
        compute_dtype = x1.dtype
    x1c = x1.astype(compute_dtype)
    x2c = x2.astype(compute_dtype)
    # Split W1 once (tiny, wrapper-side) so the activation concat never happens.
    w1a = w1[:D1].astype(compute_dtype)
    w1b = w1[D1:].astype(compute_dtype)
    w2c = w2.astype(compute_dtype)
    # Biases stay f32: the bias/ReLU epilogue runs in f32 on the VPU.
    b1_2d = b1.reshape(1, H).astype(jnp.float32)
    b2_2d = b2.reshape(1, O).astype(jnp.float32)

    # Batch tile: >= 2 grid steps when possible (feeds both v7x TensorCores via
    # the "parallel" axis), multiple of 8 sublanes, no batch padding.
    if B <= 8:
        TB = B
    else:
        TB = min(block_b, pl.cdiv(B, 2))
        TB = max(8, (TB // 8) * 8)
    grid = (pl.cdiv(B, TB),)

    resident = pl.Buffered(1)   # constant index_map inputs: single-buffered VMEM
    out = pl.pallas_call(
        _mlp_kernel,
        out_shape=jax.ShapeDtypeStruct((B, O), jnp.float32),
        grid=grid,
        in_specs=[
            pl.BlockSpec((TB, D1), lambda i: (i, 0)),                            # streamed x1
            pl.BlockSpec((TB, D2), lambda i: (i, 0)),                            # streamed x2
            pl.BlockSpec((D1, H), lambda i: (0, 0), pipeline_mode=resident),     # W1[:D1]
            pl.BlockSpec((D2, H), lambda i: (0, 0), pipeline_mode=resident),     # W1[D1:]
            pl.BlockSpec((1, H), lambda i: (0, 0), pipeline_mode=resident),      # b1
            pl.BlockSpec((H, O), lambda i: (0, 0), pipeline_mode=resident),      # W2
            pl.BlockSpec((1, O), lambda i: (0, 0), pipeline_mode=resident),      # b2
        ],
        out_specs=pl.BlockSpec((TB, O), lambda i: (i, 0)),
        compiler_params=pltpu.CompilerParams(
            dimension_semantics=("parallel",),      # shards batch across v7x's 2 TCs
        ),
    )(x1c, x2c, w1a, w1b, b1_2d, w2c, b2_2d)
    return out


def _reference(x1, x2, w1, b1, w2, b2):
    hi = jax.lax.Precision.HIGHEST
    x = jnp.concatenate([x1, x2], axis=1)
    h = jnp.maximum(jnp.dot(x, w1, precision=hi) + b1, 0.0)
    return jnp.dot(h, w2, precision=hi) + b2


if __name__ == "__main__":
    # Module hyper-params (small, consistent with the forward pass; conf=PRE).
    input_dim_1 = 32
    input_dim_2 = 32
    output_dim = 16
    batch = 256                                # -> TB=128, 2 parallel grid steps
    input_dim = input_dim_1 + input_dim_2
    hidden_dim = input_dim                     # hidden_dim == -1 -> input_dim

    key = jax.random.PRNGKey(0)
    k_x1, k_x2, k_w1, k_b1, k_w2, k_b2 = jax.random.split(key, 6)

    x1 = jax.random.normal(k_x1, (batch, input_dim_1), dtype=jnp.float32)
    x2 = jax.random.normal(k_x2, (batch, input_dim_2), dtype=jnp.float32)

    # Deterministic parameter init (Linear-like scaling), stored as (in, out).
    w1 = jax.random.normal(k_w1, (input_dim, hidden_dim), dtype=jnp.float32) / jnp.sqrt(input_dim)
    b1 = jax.random.normal(k_b1, (hidden_dim,), dtype=jnp.float32) * 0.01
    w2 = jax.random.normal(k_w2, (hidden_dim, output_dim), dtype=jnp.float32) / jnp.sqrt(hidden_dim)
    b2 = jax.random.normal(k_b2, (output_dim,), dtype=jnp.float32) * 0.01

    ref = _reference(x1, x2, w1, b1, w2, b2)

    # f32 streaming path: tight check vs reference.
    out_f32 = jax.block_until_ready(pairs_fuse_forward(x1, x2, w1, b1, w2, b2))
    assert out_f32.shape == (batch, output_dim)
    assert jnp.allclose(out_f32, ref, atol=1e-4, rtol=1e-4), "f32 mismatch vs reference"

    # bf16 streaming path (bandwidth-optimized configuration on v6e/v7x): looser check.
    out_bf16 = jax.block_until_ready(
        pairs_fuse_forward(x1, x2, w1, b1, w2, b2, compute_dtype=jnp.bfloat16))
    assert out_bf16.shape == (batch, output_dim)
    assert jnp.allclose(out_bf16, ref, atol=5e-2, rtol=5e-2), "bf16 mismatch vs reference"

    print("KERNEL_OK")
</pallas_src>

<mosaic_0001>
module attributes {stable_mosaic.version = 11 : i64} {
  func.func @_mlp_kernel(%arg0: i32, %arg1: memref<128x32xf32, #tpu.memory_space<vmem>>, %arg2: memref<128x32xf32, #tpu.memory_space<vmem>>, %arg3: memref<32x64xf32, #tpu.memory_space<vmem>>, %arg4: memref<32x64xf32, #tpu.memory_space<vmem>>, %arg5: memref<1x64xf32, #tpu.memory_space<vmem>>, %arg6: memref<64x16xf32, #tpu.memory_space<vmem>>, %arg7: memref<1x16xf32, #tpu.memory_space<vmem>>, %arg8: memref<128x16xf32, #tpu.memory_space<vmem>>) attributes {dimension_semantics = [#tpu.dimension_semantics<parallel>], iteration_bounds = array<i64: 2>, scalar_prefetch = 0 : i64, scratch_operands = 0 : i64, tpu.core_type = #tpu.core_type<tc>, window_params = [{transform_indices = @transform_0, window_bounds = array<i64: 128, 32>}, {transform_indices = @transform_1, window_bounds = array<i64: 128, 32>}, {pipeline_mode = #tpu.pipeline_mode<synchronous>, transform_indices = @transform_2, window_bounds = array<i64: 32, 64>}, {pipeline_mode = #tpu.pipeline_mode<synchronous>, transform_indices = @transform_3, window_bounds = array<i64: 32, 64>}, {pipeline_mode = #tpu.pipeline_mode<synchronous>, transform_indices = @transform_4, window_bounds = array<i64: 1, 64>}, {pipeline_mode = #tpu.pipeline_mode<synchronous>, transform_indices = @transform_5, window_bounds = array<i64: 64, 16>}, {pipeline_mode = #tpu.pipeline_mode<synchronous>, transform_indices = @transform_6, window_bounds = array<i64: 1, 16>}, {transform_indices = @transform_7, window_bounds = array<i64: 128, 16>}]} {
    %c0 = arith.constant 0 : index
    %c0_0 = arith.constant 0 : index
    %0 = vector.load %arg1[%c0, %c0_0] : memref<128x32xf32, #tpu.memory_space<vmem>>, vector<128x32xf32>
    %c0_1 = arith.constant 0 : index
    %c0_2 = arith.constant 0 : index
    %1 = vector.load %arg3[%c0_1, %c0_2] : memref<32x64xf32, #tpu.memory_space<vmem>>, vector<32x64xf32>
    %cst = arith.constant dense<0.000000e+00> : vector<128x64xf32>
    %2 = tpu.matmul %0, %1, %cst {dimension_numbers = #tpu.dot_dimension_numbers<[1], [0], [0], [1], [0, 0, 1, 1], [], []>} : vector<128x32xf32>, vector<32x64xf32>, vector<128x64xf32> -> vector<128x64xf32>
    %c0_3 = arith.constant 0 : index
    %c0_4 = arith.constant 0 : index
    %3 = vector.load %arg2[%c0_3, %c0_4] : memref<128x32xf32, #tpu.memory_space<vmem>>, vector<128x32xf32>
    %c0_5 = arith.constant 0 : index
    %c0_6 = arith.constant 0 : index
    %4 = vector.load %arg4[%c0_5, %c0_6] : memref<32x64xf32, #tpu.memory_space<vmem>>, vector<32x64xf32>
    %cst_7 = arith.constant dense<0.000000e+00> : vector<128x64xf32>
    %5 = tpu.matmul %3, %4, %cst_7 {dimension_numbers = #tpu.dot_dimension_numbers<[1], [0], [0], [1], [0, 0, 1, 1], [], []>} : vector<128x32xf32>, vector<32x64xf32>, vector<128x64xf32> -> vector<128x64xf32>
    %6 = arith.addf %2, %5 : vector<128x64xf32>
    %c0_8 = arith.constant 0 : index
    %c0_9 = arith.constant 0 : index
    %7 = vector.load %arg5[%c0_8, %c0_9] : memref<1x64xf32, #tpu.memory_space<vmem>>, vector<1x64xf32>
    %8 = vector.broadcast %7 : vector<1x64xf32> to vector<128x64xf32>
    %9 = arith.addf %6, %8 : vector<128x64xf32>
    %cst_10 = arith.constant 0.000000e+00 : f32
    %10 = vector.broadcast %cst_10 : f32 to vector<128x64xf32>
    %11 = arith.maximumf %9, %10 : vector<128x64xf32>
    %c0_11 = arith.constant 0 : index
    %c0_12 = arith.constant 0 : index
    %12 = vector.load %arg6[%c0_11, %c0_12] : memref<64x16xf32, #tpu.memory_space<vmem>>, vector<64x16xf32>
    %cst_13 = arith.constant dense<0.000000e+00> : vector<128x16xf32>
    %13 = tpu.matmul %11, %12, %cst_13 {dimension_numbers = #tpu.dot_dimension_numbers<[1], [0], [0], [1], [0, 0, 1, 1], [], []>} : vector<128x64xf32>, vector<64x16xf32>, vector<128x16xf32> -> vector<128x16xf32>
    %c0_14 = arith.constant 0 : index
    %c0_15 = arith.constant 0 : index
    %14 = vector.load %arg7[%c0_14, %c0_15] : memref<1x16xf32, #tpu.memory_space<vmem>>, vector<1x16xf32>
    %15 = vector.broadcast %14 : vector<1x16xf32> to vector<128x16xf32>
    %16 = arith.addf %13, %15 : vector<128x16xf32>
    %c0_16 = arith.constant 0 : index
    %c0_17 = arith.constant 0 : index
    %17 = vector.load %arg8[%c0_16, %c0_17] : memref<128x16xf32, #tpu.memory_space<vmem>>, vector<128x16xf32>
    tpu.vector_store %arg8[%c0_16, %c0_17], %16 {strides = array<i32>} : memref<128x16xf32, #tpu.memory_space<vmem>>, vector<128x16xf32>,
    return
  }
  func.func @transform_0(%arg0: i32) -> (i32, i32) {
    %c0_i32 = arith.constant 0 : i32
    %c0_i32_0 = arith.constant 0 : i32
    return %arg0, %c0_i32 : i32, i32
  }
  func.func @transform_1(%arg0: i32) -> (i32, i32) {
    %c0_i32 = arith.constant 0 : i32
    %c0_i32_0 = arith.constant 0 : i32
    return %arg0, %c0_i32 : i32, i32
  }
  func.func @transform_2(%arg0: i32) -> (i32, i32) {
    %c0_i32 = arith.constant 0 : i32
    %c0_i32_0 = arith.constant 0 : i32
    %c0_i32_1 = arith.constant 0 : i32
    return %c0_i32, %c0_i32_0 : i32, i32
  }
  func.func @transform_3(%arg0: i32) -> (i32, i32) {
    %c0_i32 = arith.constant 0 : i32
    %c0_i32_0 = arith.constant 0 : i32
    %c0_i32_1 = arith.constant 0 : i32
    return %c0_i32, %c0_i32_0 : i32, i32
  }
  func.func @transform_4(%arg0: i32) -> (i32, i32) {
    %c0_i32 = arith.constant 0 : i32
    %c0_i32_0 = arith.constant 0 : i32
    %c0_i32_1 = arith.constant 0 : i32
    return %c0_i32, %c0_i32_0 : i32, i32
  }
  func.func @transform_5(%arg0: i32) -> (i32, i32) {
    %c0_i32 = arith.constant 0 : i32
    %c0_i32_0 = arith.constant 0 : i32
    %c0_i32_1 = arith.constant 0 : i32
    return %c0_i32, %c0_i32_0 : i32, i32
  }
  func.func @transform_6(%arg0: i32) -> (i32, i32) {
    %c0_i32 = arith.constant 0 : i32
    %c0_i32_0 = arith.constant 0 : i32
    %c0_i32_1 = arith.constant 0 : i32
    return %c0_i32, %c0_i32_0 : i32, i32
  }
  func.func @transform_7(%arg0: i32) -> (i32, i32) {
    %c0_i32 = arith.constant 0 : i32
    %c0_i32_0 = arith.constant 0 : i32
    return %arg0, %c0_i32 : i32, i32
  }
}

</mosaic_0001>

<llo_original>
// kernel: tpu_custom_call.1
$region0: #{tpu_custom_call.1}
  #allocation0 [shape = 'u32[]', space=smem, size = 0x4, offset = 0x4, fixed_abs, tag = 'smem constant byte address 0x4 - core index']
  #allocation1 [shape = 'u32[72,128]{1,0:T(1,128)}', space=vmem, size = 0x9000, scoped, tag = 'internal scratch']
  %s0 = inlined_call_operand.vmem [shape: f32[256,32], index: 0, kind: input, shape index: {}]
  %s1 = inlined_call_operand.vmem [shape: f32[256,32], index: 1, kind: input, shape index: {}]
  %s2 = inlined_call_operand.vmem [shape: f32[32,64], index: 2, kind: input, shape index: {}]
  %s3 = inlined_call_operand.vmem [shape: f32[32,64], index: 3, kind: input, shape index: {}]
  %s4 = inlined_call_operand.vmem [shape: f32[1,64], index: 4, kind: input, shape index: {}]
  %s5 = inlined_call_operand.vmem [shape: f32[64,16], index: 5, kind: input, shape index: {}]
  %s6 = inlined_call_operand.vmem [shape: f32[1,16], index: 6, kind: input, shape index: {}]
  %s7 = inlined_call_operand.vmem [shape: f32[256,16], index: 7, kind: output, shape index: {}]
  %s8 = sld [smem:[#allocation0]]
  $region61: #{tpu_custom_call.1} parent=0
    _
  %s10 = ssub.s32 1, %s8
  %s11 = scalar_select 0, %s10, %s8
  loop: start=0, step=1, limit=4
  $region2: #{tpu_custom_call.1} parent=0 // loop_pre_header
    _
  $region3: #{tpu_custom_call.1} parent=0 // loop_header
    %s13 = sphi 0, %s17
    %p14 = scmp.ge.s32.totalorder %s13, 4
    %s23 = sphi 0, %s25
    %s26 = sphi 0, %s23
    %s27 = sphi 0, %s26
    %s43 = sphi 0, %s27
    %s49 = sphi 0, %s51
    %s52 = sphi 0, %s49
    %s53 = sphi 0, %s52
    %s69 = sphi 0, %s53
    %s73 = sphi 0, %s73
    %s75 = sphi 0, %s73
    %s76 = sphi 0, %s75
    %s90 = sphi 0, %s76
    %s94 = sphi 0, %s94
    %s96 = sphi 0, %s94
    %s97 = sphi 0, %s96
    %s111 = sphi 0, %s97
    %s115 = sphi 0, %s115
    %s117 = sphi 0, %s115
    %s118 = sphi 0, %s117
    %s132 = sphi 0, %s118
    %s136 = sphi 0, %s136
    %s138 = sphi 0, %s136
    %s139 = sphi 0, %s138
    %s153 = sphi 0, %s139
    %s157 = sphi 0, %s157
    %s159 = sphi 0, %s157
    %s160 = sphi 0, %s159
    %s174 = sphi 0, %s160
    %s180 = sphi 0, %s182
    %s183 = sphi 0, %s180
    %s184 = sphi 0, %s183
    %s200 = sphi 0, %s184
  $region4: #{tpu_custom_call.1} parent=0 // loop_header_branch
    %16 = sbr.rel (%p14) target = $region8
  $region5: #{tpu_custom_call.1} parent=0 // loop_body
    %s18 = ssub.s32 %s13, 1
    %s19 = ssub.s32 %s13, 2
    %s20 = sadd.s32 %s13, 1
    %s21 = ssub.s32 %s13, %s20
    %p22 = scmp.eq.s32.totalorder %s21, 0
    %s24 = sadd.s32 %s23, 1
    %s25 = scalar_select %p22, %s23, %s24
    %p28 = pneg %p22
    %p29 = scmp.eq.s32.totalorder %s13, 1
    %p30 = por %p28, %p29
    %p31 = scmp.ne.s32.totalorder %s23, %s26
    %p32 = scmp.eq.s32.totalorder %s13, 0
    %p33 = por %p31, %p32
    %p34 = scmp.ne.s32.totalorder %s23, %s26
    %p35 = scmp.eq.s32.totalorder %s18, 1
    %p36 = por %p34, %p35
    %p37 = scmp.ne.s32.totalorder %s26, %s27
    %p38 = scmp.eq.s32.totalorder %s18, 0
    %p39 = por %p37, %p38
    %p40 = scmp.ne.s32.totalorder %s26, %s27
    %p41 = scmp.eq.s32.totalorder %s19, 1
    %p42 = por %p40, %p41
    %p44 = scmp.ne.s32.totalorder %s27, %s43
    %p45 = scmp.eq.s32.totalorder %s19, 0
    %p46 = por %p44, %p45
    %s47 = ssub.s32 %s13, %s20
    %p48 = scmp.eq.s32.totalorder %s47, 0
    %s50 = sadd.s32 %s49, 1
    %s51 = scalar_select %p48, %s49, %s50
    %p54 = pneg %p48
    %p55 = scmp.eq.s32.totalorder %s13, 1
    %p56 = por %p54, %p55
    %p57 = scmp.ne.s32.totalorder %s49, %s52
    %p58 = scmp.eq.s32.totalorder %s13, 0
    %p59 = por %p57, %p58
    %p60 = scmp.ne.s32.totalorder %s49, %s52
    %p61 = scmp.eq.s32.totalorder %s18, 1
    %p62 = por %p60, %p61
    %p63 = scmp.ne.s32.totalorder %s52, %s53
    %p64 = scmp.eq.s32.totalorder %s18, 0
    %p65 = por %p63, %p64
    %p66 = scmp.ne.s32.totalorder %s52, %s53
    %p67 = scmp.eq.s32.totalorder %s19, 1
    %p68 = por %p66, %p67
    %p70 = scmp.ne.s32.totalorder %s53, %s69
    %p71 = scmp.eq.s32.totalorder %s19, 0
    %p72 = por %p70, %p71
    %s74 = sadd.s32 %s73, 1
    %p77 = scmp.eq.s32.totalorder %s13, 1
    %p78 = scmp.ne.s32.totalorder %s73, %s75
    %p79 = scmp.eq.s32.totalorder %s13, 0
    %p80 = por %p78, %p79
    %p81 = scmp.ne.s32.totalorder %s73, %s75
    %p82 = scmp.eq.s32.totalorder %s18, 1
    %p83 = por %p81, %p82
    %p84 = scmp.ne.s32.totalorder %s75, %s76
    %p85 = scmp.eq.s32.totalorder %s18, 0
    %p86 = por %p84, %p85
    %p87 = scmp.ne.s32.totalorder %s75, %s76
    %p88 = scmp.eq.s32.totalorder %s19, 1
    %p89 = por %p87, %p88
    %p91 = scmp.ne.s32.totalorder %s76, %s90
    %p92 = scmp.eq.s32.totalorder %s19, 0
    %p93 = por %p91, %p92
    %s95 = sadd.s32 %s94, 1
    %p98 = scmp.eq.s32.totalorder %s13, 1
    %p99 = scmp.ne.s32.totalorder %s94, %s96
    %p100 = scmp.eq.s32.totalorder %s13, 0
    %p101 = por %p99, %p100
    %p102 = scmp.ne.s32.totalorder %s94, %s96
    %p103 = scmp.eq.s32.totalorder %s18, 1
    %p104 = por %p102, %p103
    %p105 = scmp.ne.s32.totalorder %s96, %s97
    %p106 = scmp.eq.s32.totalorder %s18, 0
    %p107 = por %p105, %p106
    %p108 = scmp.ne.s32.totalorder %s96, %s97
    %p109 = scmp.eq.s32.totalorder %s19, 1
    %p110 = por %p108, %p109
    %p112 = scmp.ne.s32.totalorder %s97, %s111
    %p113 = scmp.eq.s32.totalorder %s19, 0
    %p114 = por %p112, %p113
    %s116 = sadd.s32 %s115, 1
    %p119 = scmp.eq.s32.totalorder %s13, 1
    %p120 = scmp.ne.s32.totalorder %s115, %s117
    %p121 = scmp.eq.s32.totalorder %s13, 0
    %p122 = por %p120, %p121
    %p123 = scmp.ne.s32.totalorder %s115, %s117
    %p124 = scmp.eq.s32.totalorder %s18, 1
    %p125 = por %p123, %p124
    %p126 = scmp.ne.s32.totalorder %s117, %s118
    %p127 = scmp.eq.s32.totalorder %s18, 0
    %p128 = por %p126, %p127
    %p129 = scmp.ne.s32.totalorder %s117, %s118
    %p130 = scmp.eq.s32.totalorder %s19, 1
    %p131 = por %p129, %p130
    %p133 = scmp.ne.s32.totalorder %s118, %s132
    %p134 = scmp.eq.s32.totalorder %s19, 0
    %p135 = por %p133, %p134
    %s137 = sadd.s32 %s136, 1
    %p140 = scmp.eq.s32.totalorder %s13, 1
    %p141 = scmp.ne.s32.totalorder %s136, %s138
    %p142 = scmp.eq.s32.totalorder %s13, 0
    %p143 = por %p141, %p142
    %p144 = scmp.ne.s32.totalorder %s136, %s138
    %p145 = scmp.eq.s32.totalorder %s18, 1
    %p146 = por %p144, %p145
    %p147 = scmp.ne.s32.totalorder %s138, %s139
    %p148 = scmp.eq.s32.totalorder %s18, 0
    %p149 = por %p147, %p148
    %p150 = scmp.ne.s32.totalorder %s138, %s139
    %p151 = scmp.eq.s32.totalorder %s19, 1
    %p152 = por %p150, %p151
    %p154 = scmp.ne.s32.totalorder %s139, %s153
    %p155 = scmp.eq.s32.totalorder %s19, 0
    %p156 = por %p154, %p155
    %s158 = sadd.s32 %s157, 1
    %p161 = scmp.eq.s32.totalorder %s13, 1
    %p162 = scmp.ne.s32.totalorder %s157, %s159
    %p163 = scmp.eq.s32.totalorder %s13, 0
    %p164 = por %p162, %p163
    %p165 = scmp.ne.s32.totalorder %s157, %s159
    %p166 = scmp.eq.s32.totalorder %s18, 1
    %p167 = por %p165, %p166
    %p168 = scmp.ne.s32.totalorder %s159, %s160
    %p169 = scmp.eq.s32.totalorder %s18, 0
    %p170 = por %p168, %p169
    %p171 = scmp.ne.s32.totalorder %s159, %s160
    %p172 = scmp.eq.s32.totalorder %s19, 1
    %p173 = por %p171, %p172
    %p175 = scmp.ne.s32.totalorder %s160, %s174
    %p176 = scmp.eq.s32.totalorder %s19, 0
    %p177 = por %p175, %p176
    %s178 = ssub.s32 %s13, %s20
    %p179 = scmp.eq.s32.totalorder %s178, 0
    %s181 = sadd.s32 %s180, 1
    %s182 = scalar_select %p179, %s180, %s181
    %p185 = pneg %p179
    %p186 = scmp.eq.s32.totalorder %s13, 1
    %p187 = por %p185, %p186
    %p188 = scmp.ne.s32.totalorder %s180, %s183
    %p189 = scmp.eq.s32.totalorder %s13, 0
    %p190 = por %p188, %p189
    %p191 = scmp.ne.s32.totalorder %s180, %s183
    %p192 = scmp.eq.s32.totalorder %s18, 1
    %p193 = por %p191, %p192
    %p194 = scmp.ne.s32.totalorder %s183, %s184
    %p195 = scmp.eq.s32.totalorder %s18, 0
    %p196 = por %p194, %p195
    %p197 = scmp.ne.s32.totalorder %s183, %s184
    %p198 = scmp.eq.s32.totalorder %s19, 1
    %p199 = por %p197, %p198
    %p201 = scmp.ne.s32.totalorder %s184, %s200
    %p202 = scmp.eq.s32.totalorder %s19, 0
    %p203 = por %p201, %p202
    %p204 = scmp.le.s32.totalorder 1, %s13
    %p205 = scmp.lt.s32.totalorder %s13, 3
    %p206 = pnand %p204, %p205
    %p207 = pneg %p206
    // Predicated region
    $region9: #{tpu_custom_call.1} parent=5 // pred_check
      _
    $region10: #{tpu_custom_call.1} parent=5 // pred_check_branch
      %209 = sbr.rel (%p206) target = $region12
    $region11: #{tpu_custom_call.1} parent=5 // pred_region
      %s210 = ssub.s32 %s13, 1
      // Predicated region
      $region13: #{tpu_custom_call.1} parent=11 // pred_check
        %p211 = pneg %p86
      $region14: #{tpu_custom_call.1} parent=11 // pred_check_branch
        %213 = sbr.rel (%p211) target = $region16
      $region15: #{tpu_custom_call.1} parent=11 // pred_region
        _
      $region16: #{tpu_custom_call.1} parent=11 // pred_fallthru
        _
      // Predicated region
      $region17: #{tpu_custom_call.1} parent=11 // pred_check
        %p214 = pneg %p107
      $region18: #{tpu_custom_call.1} parent=11 // pred_check_branch
        %216 = sbr.rel (%p214) target = $region20
      $region19: #{tpu_custom_call.1} parent=11 // pred_region
        _
      $region20: #{tpu_custom_call.1} parent=11 // pred_fallthru
        _
      // Predicated region
      $region21: #{tpu_custom_call.1} parent=11 // pred_check
        %p217 = pneg %p128
      $region22: #{tpu_custom_call.1} parent=11 // pred_check_branch
        %219 = sbr.rel (%p217) target = $region24
      $region23: #{tpu_custom_call.1} parent=11 // pred_region
        _
      $region24: #{tpu_custom_call.1} parent=11 // pred_fallthru
        _
      // Predicated region
      $region25: #{tpu_custom_call.1} parent=11 // pred_check
        %p220 = pneg %p149
      $region26: #{tpu_custom_call.1} parent=11 // pred_check_branch
        %222 = sbr.rel (%p220) target = $region28
      $region27: #{tpu_custom_call.1} parent=11 // pred_region
        _
      $region28: #{tpu_custom_call.1} parent=11 // pred_fallthru
        _
      // Predicated region
      $region29: #{tpu_custom_call.1} parent=11 // pred_check
        %p223 = pneg %p170
      $region30: #{tpu_custom_call.1} parent=11 // pred_check_branch
        %225 = sbr.rel (%p223) target = $region32
      $region31: #{tpu_custom_call.1} parent=11 // pred_region
        _
      $region32: #{tpu_custom_call.1} parent=11 // pred_fallthru
        _
    $region12: #{tpu_custom_call.1} parent=5 // pred_fallthru
      _
    %p226 = scmp.lt.s32.totalorder %s13, 2
    // Predicated region
    $region33: #{tpu_custom_call.1} parent=5 // pred_check
      %p227 = pneg %p226
    $region34: #{tpu_custom_call.1} parent=5 // pred_check_branch
      %229 = sbr.rel (%p227) target = $region36
    $region35: #{tpu_custom_call.1} parent=5 // pred_region
      // Predicated region
      $region37: #{tpu_custom_call.1} parent=35 // pred_check
        %p230 = pneg %p33
      $region38: #{tpu_custom_call.1} parent=35 // pred_check_branch
        %232 = sbr.rel (%p230) target = $region40
      $region39: #{tpu_custom_call.1} parent=35 // pred_region
        %s233 = smul.u32 16, %s13
        %p234 = scmp.lt.s32.totalorder %s233, 31
        %s235 = scalar_select %p234, %s233, 31
        %s236 = smul.addr %s235, 8
        %s237 = scalar_lea.vmem %s0, %s236
        %s238 = smul.u32 16, %s13
      $region40: #{tpu_custom_call.1} parent=35 // pred_fallthru
        _
      // Predicated region
      $region41: #{tpu_custom_call.1} parent=35 // pred_check
        %p239 = pneg %p59
      $region42: #{tpu_custom_call.1} parent=35 // pred_check_branch
        %241 = sbr.rel (%p239) target = $region44
      $region43: #{tpu_custom_call.1} parent=35 // pred_region
        %s242 = smul.u32 16, %s13
        %p243 = scmp.lt.s32.totalorder %s242, 31
        %s244 = scalar_select %p243, %s242, 31
        %s245 = smul.addr %s244, 8
        %s246 = scalar_lea.vmem %s1, %s245
        %s247 = smul.u32 16, %s13
      $region44: #{tpu_custom_call.1} parent=35 // pred_fallthru
        _
    $region36: #{tpu_custom_call.1} parent=5 // pred_fallthru
      _
    %p248 = scmp.le.s32.totalorder 1, %s13
    %p249 = scmp.lt.s32.totalorder %s13, 3
    %p250 = pnand %p248, %p249
    %p251 = pneg %p250
    // Predicated region
    $region45: #{tpu_custom_call.1} parent=5 // pred_check
      _
    $region46: #{tpu_custom_call.1} parent=5 // pred_check_branch
      %253 = sbr.rel (%p250) target = $region48
    $region47: #{tpu_custom_call.1} parent=5 // pred_region
      %s254 = ssub.s32 %s13, 1
      %s255 = smul.u32 16, %s18
      %p256 = scmp.lt.s32.totalorder %s255, 31
      %s257 = scalar_select %p256, %s255, 31
      %s258 = smul.addr %s257, 8
      %s259 = scalar_lea.vmem %s0, %s258
      %p260 = pneg %p39
      %p261 = pneg %p36
      %s262 = smul.u32 16, %s18
      %p263 = scmp.lt.s32.totalorder %s262, 31
      %s264 = scalar_select %p263, %s262, 31
      %s265 = smul.addr %s264, 8
      %s266 = scalar_lea.vmem %s1, %s265
      %p267 = pneg %p65
      %p268 = pneg %p62
      %p269 = pneg %p86
      %p270 = pneg %p83
      %p271 = pneg %p107
      %p272 = pneg %p104
      %p273 = pneg %p128
      %p274 = pneg %p125
      %p275 = pneg %p149
      %p276 = pneg %p146
      %p277 = pneg %p170
      %p278 = pneg %p167
      %p279 = pneg %p196
      %p280 = pneg %p193
      %s281 = smul.u32 16, %s18
      %p282 = scmp.lt.s32.totalorder %s281, 31
      %s283 = scalar_select %p282, %s281, 31
      %s284 = smul.addr %s283, 8
      %s285 = scalar_lea.vmem %s7, %s284
      %s286 = smul.u32 16, %s18
      %p287 = scmp.lt.s32.totalorder %s286, 31
      %s288 = scalar_select %p287, %s286, 31
      %s289 = smul.addr %s288, 8
      %s290 = scalar_lea.vmem %s0, %s289
      %s291 = smul.u32 16, %s18
      %s292 = smul.u32 16, %s18
      %p293 = scmp.lt.s32.totalorder %s292, 31
      %s294 = scalar_select %p293, %s292, 31
      %s295 = smul.addr %s294, 8
      %s296 = scalar_lea.vmem %s1, %s295
      %s297 = smul.u32 16, %s18
      %s298 = smul.u32 16, %s18
      %p299 = scmp.lt.s32.totalorder %s298, 31
      %s300 = scalar_select %p299, %s298, 31
      %s301 = smul.addr %s300, 8
      %s302 = scalar_lea.vmem %s7, %s301
      %s303 = smul.u32 16, %s18
      %v304 = vld [vmem:[%s290] sm:$0xff]
      %v305 = vld [vmem:[%s290 + $0x8] sm:$0xff]
      %v306 = vld [vmem:[%s290 + $0x10] sm:$0xff]
      %v307 = vld [vmem:[%s290 + $0x18] sm:$0xff]
      %v308 = vld [vmem:[%s290 + $0x20] sm:$0xff]
      %v309 = vld [vmem:[%s290 + $0x28] sm:$0xff]
      %v310 = vld [vmem:[%s290 + $0x30] sm:$0xff]
      %v311 = vld [vmem:[%s290 + $0x38] sm:$0xff]
      %v312 = vld [vmem:[%s290 + $0x40] sm:$0xff]
      %v313 = vld [vmem:[%s290 + $0x48] sm:$0xff]
      %v314 = vld [vmem:[%s290 + $0x50] sm:$0xff]
      %v315 = vld [vmem:[%s290 + $0x58] sm:$0xff]
      %v316 = vld [vmem:[%s290 + $0x60] sm:$0xff]
      %v317 = vld [vmem:[%s290 + $0x68] sm:$0xff]
      %v318 = vld [vmem:[%s290 + $0x70] sm:$0xff]
      %v319 = vld [vmem:[%s290 + $0x78] sm:$0xff]
      %v320 = vld [vmem:[%s2] sm:$0xff]
      %v321 = vld [vmem:[%s2 + $0x8] sm:$0xff]
      %v322 = vld [vmem:[%s2 + $0x10] sm:$0xff]
      %v323 = vld [vmem:[%s2 + $0x18] sm:$0xff]
      %v324 = vld [vmem:[%s296] sm:$0xff]
      %v325 = vld [vmem:[%s296 + $0x8] sm:$0xff]
      %v326 = vld [vmem:[%s296 + $0x10] sm:$0xff]
      %v327 = vld [vmem:[%s296 + $0x18] sm:$0xff]
      %v328 = vld [vmem:[%s296 + $0x20] sm:$0xff]
      %v329 = vld [vmem:[%s296 + $0x28] sm:$0xff]
      %v330 = vld [vmem:[%s296 + $0x30] sm:$0xff]
      %v331 = vld [vmem:[%s296 + $0x38] sm:$0xff]
      %v332 = vld [vmem:[%s296 + $0x40] sm:$0xff]
      %v333 = vld [vmem:[%s296 + $0x48] sm:$0xff]
      %v334 = vld [vmem:[%s296 + $0x50] sm:$0xff]
      %v335 = vld [vmem:[%s296 + $0x58] sm:$0xff]
      %v336 = vld [vmem:[%s296 + $0x60] sm:$0xff]
      %v337 = vld [vmem:[%s296 + $0x68] sm:$0xff]
      %v338 = vld [vmem:[%s296 + $0x70] sm:$0xff]
      %v339 = vld [vmem:[%s296 + $0x78] sm:$0xff]
      %v340 = vld [vmem:[%s3] sm:$0xff]
      %v341 = vld [vmem:[%s3 + $0x8] sm:$0xff]
      %v342 = vld [vmem:[%s3 + $0x10] sm:$0xff]
      %v343 = vld [vmem:[%s3 + $0x18] sm:$0xff]
      %vm344 = vcmask 261120
      %v346 = vsel %vm344, %v324, 0
      %v349 = vsel %vm344, %v325, 0
      %v352 = vsel %vm344, %v326, 0
      %v355 = vsel %vm344, %v327, 0
      %v358 = vsel %vm344, %v328, 0
      %v361 = vsel %vm344, %v329, 0
      %v364 = vsel %vm344, %v330, 0
      %v367 = vsel %vm344, %v331, 0
      %v370 = vsel %vm344, %v332, 0
      %v373 = vsel %vm344, %v333, 0
      %v376 = vsel %vm344, %v334, 0
      %v379 = vsel %vm344, %v335, 0
      %v382 = vsel %vm344, %v336, 0
      %v385 = vsel %vm344, %v337, 0
      %v388 = vsel %vm344, %v338, 0
      %v391 = vsel %vm344, %v339, 0
      %393 = vmatpush.msra.mxu0 0.0
      %394 = vmatpush.msra.mxu0 0.0
      %395 = vmatpush.msra.mxu0 0.0
      %396 = vmatpush.msra.mxu0 0.0
      %397 = vmatpush.msra.mxu0 0.0
      %398 = vmatpush.msra.mxu0 0.0
      %399 = vmatpush.msra.mxu0 0.0
      %400 = vmatpush.msra.mxu0 0.0
      %401 = vmatpush.msra.mxu0 0.0
      %402 = vmatpush.msra.mxu0 0.0
      %403 = vmatpush.msra.mxu0 0.0
      %404 = vmatpush.msra.mxu0 0.0
      %405 = vmatpush.msra.mxu0 %v343
      %406 = vmatpush.msra.mxu0 %v342
      %407 = vmatpush.msra.mxu0 %v341
      %408 = vmatpush.msra.mxu0 %v340
      %409 = vmatmul.f32.gmra.mxu0 %v346
      %v410 = vpop.f32.mrf.mxu0
      %v411 = vadd.f32 0.0, %v410
      %412 = vmatmul.f32.gmra.mxu0 %v349
      %v413 = vpop.f32.mrf.mxu0
      %v414 = vadd.f32 0.0, %v413
      %415 = vmatmul.f32.gmra.mxu0 %v352
      %v416 = vpop.f32.mrf.mxu0
      %v417 = vadd.f32 0.0, %v416
      %418 = vmatmul.f32.gmra.mxu0 %v355
      %v419 = vpop.f32.mrf.mxu0
      %v420 = vadd.f32 0.0, %v419
      %421 = vmatmul.f32.gmra.mxu0 %v358
      %v422 = vpop.f32.mrf.mxu0
      %v423 = vadd.f32 0.0, %v422
      %424 = vmatmul.f32.gmra.mxu0 %v361
      %v425 = vpop.f32.mrf.mxu0
      %v426 = vadd.f32 0.0, %v425
      %427 = vmatmul.f32.gmra.mxu0 %v364
      %v428 = vpop.f32.mrf.mxu0
      %v429 = vadd.f32 0.0, %v428
      %430 = vmatmul.f32.gmra.mxu0 %v367
      %v431 = vpop.f32.mrf.mxu0
      %v432 = vadd.f32 0.0, %v431
      %433 = vmatmul.f32.gmra.mxu0 %v370
      %v434 = vpop.f32.mrf.mxu0
      %v435 = vadd.f32 0.0, %v434
      %436 = vmatmul.f32.gmra.mxu0 %v373
      %v437 = vpop.f32.mrf.mxu0
      %v438 = vadd.f32 0.0, %v437
      %439 = vmatmul.f32.gmra.mxu0 %v376
      %v440 = vpop.f32.mrf.mxu0
      %v441 = vadd.f32 0.0, %v440
      %442 = vmatmul.f32.gmra.mxu0 %v379
      %v443 = vpop.f32.mrf.mxu0
      %v444 = vadd.f32 0.0, %v443
      %445 = vmatmul.f32.gmra.mxu0 %v382
      %v446 = vpop.f32.mrf.mxu0
      %v447 = vadd.f32 0.0, %v446
      %448 = vmatmul.f32.gmra.mxu0 %v385
      %v449 = vpop.f32.mrf.mxu0
      %v450 = vadd.f32 0.0, %v449
      %451 = vmatmul.f32.gmra.mxu0 %v388
      %v452 = vpop.f32.mrf.mxu0
      %v453 = vadd.f32 0.0, %v452
      %454 = vmatmul.f32.gmra.mxu0 %v391
      %v455 = vpop.f32.mrf.mxu0
      %v456 = vadd.f32 0.0, %v455
      %457 = vdwg.mxu0
      %v459 = vsel %vm344, %v304, 0
      %v462 = vsel %vm344, %v305, 0
      %v465 = vsel %vm344, %v306, 0
      %v468 = vsel %vm344, %v307, 0
      %v471 = vsel %vm344, %v308, 0
      %v474 = vsel %vm344, %v309, 0
      %v477 = vsel %vm344, %v310, 0
      %v480 = vsel %vm344, %v311, 0
      %v483 = vsel %vm344, %v312, 0
      %v486 = vsel %vm344, %v313, 0
      %v489 = vsel %vm344, %v314, 0
      %v492 = vsel %vm344, %v315, 0
      %v495 = vsel %vm344, %v316, 0
      %v498 = vsel %vm344, %v317, 0
      %v501 = vsel %vm344, %v318, 0
      %v504 = vsel %vm344, %v319, 0
      %506 = vmatpush.msra.mxu0 0.0
      %507 = vmatpush.msra.mxu0 0.0
      %508 = vmatpush.msra.mxu0 0.0
      %509 = vmatpush.msra.mxu0 0.0
      %510 = vmatpush.msra.mxu0 0.0
      %511 = vmatpush.msra.mxu0 0.0
      %512 = vmatpush.msra.mxu0 0.0
      %513 = vmatpush.msra.mxu0 0.0
      %514 = vmatpush.msra.mxu0 0.0
      %515 = vmatpush.msra.mxu0 0.0
      %516 = vmatpush.msra.mxu0 0.0
      %517 = vmatpush.msra.mxu0 0.0
      %518 = vmatpush.msra.mxu0 %v323
      %519 = vmatpush.msra.mxu0 %v322
      %520 = vmatpush.msra.mxu0 %v321
      %521 = vmatpush.msra.mxu0 %v320
      %522 = vmatmul.f32.gmra.mxu0 %v459
      %v523 = vpop.f32.mrf.mxu0
      %v524 = vadd.f32 %v411, %v523
      %525 = vmatmul.f32.gmra.mxu0 %v462
      %v526 = vpop.f32.mrf.mxu0
      %v527 = vadd.f32 %v414, %v526
      %528 = vmatmul.f32.gmra.mxu0 %v465
      %v529 = vpop.f32.mrf.mxu0
      %v530 = vadd.f32 %v417, %v529
      %531 = vmatmul.f32.gmra.mxu0 %v468
      %v532 = vpop.f32.mrf.mxu0
      %v533 = vadd.f32 %v420, %v532
      %534 = vmatmul.f32.gmra.mxu0 %v471
      %v535 = vpop.f32.mrf.mxu0
      %v536 = vadd.f32 %v423, %v535
      %537 = vmatmul.f32.gmra.mxu0 %v474
      %v538 = vpop.f32.mrf.mxu0
      %v539 = vadd.f32 %v426, %v538
      %540 = vmatmul.f32.gmra.mxu0 %v477
      %v541 = vpop.f32.mrf.mxu0
      %v542 = vadd.f32 %v429, %v541
      %543 = vmatmul.f32.gmra.mxu0 %v480
      %v544 = vpop.f32.mrf.mxu0
      %v545 = vadd.f32 %v432, %v544
      %546 = vmatmul.f32.gmra.mxu0 %v483
      %v547 = vpop.f32.mrf.mxu0
      %v548 = vadd.f32 %v435, %v547
      %549 = vmatmul.f32.gmra.mxu0 %v486
      %v550 = vpop.f32.mrf.mxu0
      %v551 = vadd.f32 %v438, %v550
      %552 = vmatmul.f32.gmra.mxu0 %v489
      %v553 = vpop.f32.mrf.mxu0
      %v554 = vadd.f32 %v441, %v553
      %555 = vmatmul.f32.gmra.mxu0 %v492
      %v556 = vpop.f32.mrf.mxu0
      %v557 = vadd.f32 %v444, %v556
      %558 = vmatmul.f32.gmra.mxu0 %v495
      %v559 = vpop.f32.mrf.mxu0
      %v560 = vadd.f32 %v447, %v559
      %561 = vmatmul.f32.gmra.mxu0 %v498
      %v562 = vpop.f32.mrf.mxu0
      %v563 = vadd.f32 %v450, %v562
      %564 = vmatmul.f32.gmra.mxu0 %v501
      %v565 = vpop.f32.mrf.mxu0
      %v566 = vadd.f32 %v453, %v565
      %567 = vmatmul.f32.gmra.mxu0 %v504
      %v568 = vpop.f32.mrf.mxu0
      %v569 = vadd.f32 %v456, %v568
      %570 = vdwg.mxu0
      %v571 = vld [vmem:[%s4] sm:$0x1]
      %v573 = vperm.slane %v571, 0
      %v575 = vadd.f32 %v524, %v573
      %v576 = vadd.f32 %v527, %v573
      %v577 = vadd.f32 %v530, %v573
      %v578 = vadd.f32 %v533, %v573
      %v579 = vadd.f32 %v536, %v573
      %v580 = vadd.f32 %v539, %v573
      %v581 = vadd.f32 %v542, %v573
      %v582 = vadd.f32 %v545, %v573
      %v583 = vadd.f32 %v548, %v573
      %v584 = vadd.f32 %v551, %v573
      %v585 = vadd.f32 %v554, %v573
      %v586 = vadd.f32 %v557, %v573
      %v587 = vadd.f32 %v560, %v573
      %v588 = vadd.f32 %v563, %v573
      %v589 = vadd.f32 %v566, %v573
      %v590 = vadd.f32 %v569, %v573
      %v591 = vmax.f32 %v575, 0.0
      %v592 = vmax.f32 %v576, 0.0
      %v593 = vmax.f32 %v577, 0.0
      %v594 = vmax.f32 %v578, 0.0
      %v595 = vmax.f32 %v579, 0.0
      %v596 = vmax.f32 %v580, 0.0
      %v597 = vmax.f32 %v581, 0.0
      %v598 = vmax.f32 %v582, 0.0
      %v599 = vmax.f32 %v583, 0.0
      %v600 = vmax.f32 %v584, 0.0
      %v601 = vmax.f32 %v585, 0.0
      %v602 = vmax.f32 %v586, 0.0
      %v603 = vmax.f32 %v587, 0.0
      %v604 = vmax.f32 %v588, 0.0
      %v605 = vmax.f32 %v589, 0.0
      %v606 = vmax.f32 %v590, 0.0
      %v607 = vld [vmem:[%s5] sm:$0xff]
      %v608 = vld [vmem:[%s5 + $0x8] sm:$0xff]
      %v609 = vld [vmem:[%s5 + $0x10] sm:$0xff]
      %v610 = vld [vmem:[%s5 + $0x18] sm:$0xff]
      %v611 = vld [vmem:[%s5 + $0x20] sm:$0xff]
      %v612 = vld [vmem:[%s5 + $0x28] sm:$0xff]
      %v613 = vld [vmem:[%s5 + $0x30] sm:$0xff]
      %v614 = vld [vmem:[%s5 + $0x38] sm:$0xff]
      %v615 = vld [vmem:[%s6] sm:$0x1]
      %v617 = vperm.slane %v615, 0
      %vm619 = vcmask 523264
      %v621 = vsel %vm619, %v591, 0
      %v624 = vsel %vm619, %v592, 0
      %v627 = vsel %vm619, %v593, 0
      %v630 = vsel %vm619, %v594, 0
      %v633 = vsel %vm619, %v595, 0
      %v636 = vsel %vm619, %v596, 0
      %v639 = vsel %vm619, %v597, 0
      %v642 = vsel %vm619, %v598, 0
      %v645 = vsel %vm619, %v599, 0
      %v648 = vsel %vm619, %v600, 0
      %v651 = vsel %vm619, %v601, 0
      %v654 = vsel %vm619, %v602, 0
      %v657 = vsel %vm619, %v603, 0
      %v660 = vsel %vm619, %v604, 0
      %v663 = vsel %vm619, %v605, 0
      %v666 = vsel %vm619, %v606, 0
      %668 = vmatpush.msra.mxu0 0.0
      %669 = vmatpush.msra.mxu0 0.0
      %670 = vmatpush.msra.mxu0 0.0
      %671 = vmatpush.msra.mxu0 0.0
      %672 = vmatpush.msra.mxu0 0.0
      %673 = vmatpush.msra.mxu0 0.0
      %674 = vmatpush.msra.mxu0 0.0
      %675 = vmatpush.msra.mxu0 0.0
      %676 = vmatpush.msra.mxu0 %v614
      %677 = vmatpush.msra.mxu0 %v613
      %678 = vmatpush.msra.mxu0 %v612
      %679 = vmatpush.msra.mxu0 %v611
      %680 = vmatpush.msra.mxu0 %v610
      %681 = vmatpush.msra.mxu0 %v609
      %682 = vmatpush.msra.mxu0 %v608
      %683 = vmatpush.msra.mxu0 %v607
      %684 = vmatmul.f32.gmra.mxu0 %v621
      %v685 = vpop.f32.mrf.mxu0
      %v686 = vadd.f32 %v617, %v685
      %687 = vmatmul.f32.gmra.mxu0 %v624
      %v688 = vpop.f32.mrf.mxu0
      %v689 = vadd.f32 %v617, %v688
      %690 = vmatmul.f32.gmra.mxu0 %v627
      %v691 = vpop.f32.mrf.mxu0
      %v692 = vadd.f32 %v617, %v691
      %693 = vmatmul.f32.gmra.mxu0 %v630
      %v694 = vpop.f32.mrf.mxu0
      %v695 = vadd.f32 %v617, %v694
      %696 = vmatmul.f32.gmra.mxu0 %v633
      %v697 = vpop.f32.mrf.mxu0
      %v698 = vadd.f32 %v617, %v697
      %699 = vmatmul.f32.gmra.mxu0 %v636
      %v700 = vpop.f32.mrf.mxu0
      %v701 = vadd.f32 %v617, %v700
      %702 = vmatmul.f32.gmra.mxu0 %v639
      %v703 = vpop.f32.mrf.mxu0
      %v704 = vadd.f32 %v617, %v703
      %705 = vmatmul.f32.gmra.mxu0 %v642
      %v706 = vpop.f32.mrf.mxu0
      %v707 = vadd.f32 %v617, %v706
      %708 = vmatmul.f32.gmra.mxu0 %v645
      %v709 = vpop.f32.mrf.mxu0
      %v710 = vadd.f32 %v617, %v709
      %711 = vmatmul.f32.gmra.mxu0 %v648
      %v712 = vpop.f32.mrf.mxu0
      %v713 = vadd.f32 %v617, %v712
      %714 = vmatmul.f32.gmra.mxu0 %v651
      %v715 = vpop.f32.mrf.mxu0
      %v716 = vadd.f32 %v617, %v715
      %717 = vmatmul.f32.gmra.mxu0 %v654
      %v718 = vpop.f32.mrf.mxu0
      %v719 = vadd.f32 %v617, %v718
      %720 = vmatmul.f32.gmra.mxu0 %v657
      %v721 = vpop.f32.mrf.mxu0
      %v722 = vadd.f32 %v617, %v721
      %723 = vmatmul.f32.gmra.mxu0 %v660
      %v724 = vpop.f32.mrf.mxu0
      %v725 = vadd.f32 %v617, %v724
      %726 = vmatmul.f32.gmra.mxu0 %v663
      %v727 = vpop.f32.mrf.mxu0
      %v728 = vadd.f32 %v617, %v727
      %729 = vmatmul.f32.gmra.mxu0 %v666
      %v730 = vpop.f32.mrf.mxu0
      %v731 = vadd.f32 %v617, %v730
      %732 = vdwg.mxu0
      %vm733 = vcmask 130048
      %734 = vst.msk [vmem:[%s302] sm:$0xff] %vm733, %v686
      %735 = vst.msk [vmem:[%s302 + $0x8] sm:$0xff] %vm733, %v689
      %736 = vst.msk [vmem:[%s302 + $0x10] sm:$0xff] %vm733, %v692
      %737 = vst.msk [vmem:[%s302 + $0x18] sm:$0xff] %vm733, %v695
      %738 = vst.msk [vmem:[%s302 + $0x20] sm:$0xff] %vm733, %v698
      %739 = vst.msk [vmem:[%s302 + $0x28] sm:$0xff] %vm733, %v701
      %740 = vst.msk [vmem:[%s302 + $0x30] sm:$0xff] %vm733, %v704
      %741 = vst.msk [vmem:[%s302 + $0x38] sm:$0xff] %vm733, %v707
      %742 = vst.msk [vmem:[%s302 + $0x40] sm:$0xff] %vm733, %v710
      %743 = vst.msk [vmem:[%s302 + $0x48] sm:$0xff] %vm733, %v713
      %744 = vst.msk [vmem:[%s302 + $0x50] sm:$0xff] %vm733, %v716
      %745 = vst.msk [vmem:[%s302 + $0x58] sm:$0xff] %vm733, %v719
      %746 = vst.msk [vmem:[%s302 + $0x60] sm:$0xff] %vm733, %v722
      %747 = vst.msk [vmem:[%s302 + $0x68] sm:$0xff] %vm733, %v725
      %748 = vst.msk [vmem:[%s302 + $0x70] sm:$0xff] %vm733, %v728
      %749 = vst.msk [vmem:[%s302 + $0x78] sm:$0xff] %vm733, %v731
      %s750 = smul.u32 16, %s18
      %p751 = scmp.lt.s32.totalorder %s750, 31
      %s752 = scalar_select %p751, %s750, 31
      %s753 = smul.addr %s752, 8
      %s754 = scalar_lea.vmem %s7, %s753
      // Predicated region
      $region49: #{tpu_custom_call.1} parent=47 // pred_check
        %p755 = pneg %p193
      $region50: #{tpu_custom_call.1} parent=47 // pred_check_branch
        %757 = sbr.rel (%p755) target = $region52
      $region51: #{tpu_custom_call.1} parent=47 // pred_region
        %s758 = smul.u32 16, %s18
      $region52: #{tpu_custom_call.1} parent=47 // pred_fallthru
        _
    $region48: #{tpu_custom_call.1} parent=5 // pred_fallthru
      _
    %p759 = scmp.le.s32.totalorder 2, %s13
    // Predicated region
    $region53: #{tpu_custom_call.1} parent=5 // pred_check
      %p760 = pneg %p759
    $region54: #{tpu_custom_call.1} parent=5 // pred_check_branch
      %762 = sbr.rel (%p760) target = $region56
    $region55: #{tpu_custom_call.1} parent=5 // pred_region
      %s763 = ssub.s32 %s13, 2
      // Predicated region
      $region57: #{tpu_custom_call.1} parent=55 // pred_check
        %p764 = pneg %p199
      $region58: #{tpu_custom_call.1} parent=55 // pred_check_branch
        %766 = sbr.rel (%p764) target = $region60
      $region59: #{tpu_custom_call.1} parent=55 // pred_region
        %s767 = smul.u32 16, %s19
        %p768 = scmp.lt.s32.totalorder %s767, 31
        %s769 = scalar_select %p768, %s767, 31
        %s770 = smul.addr %s769, 8
        %s771 = scalar_lea.vmem %s7, %s770
      $region60: #{tpu_custom_call.1} parent=55 // pred_fallthru
        _
    $region56: #{tpu_custom_call.1} parent=5 // pred_fallthru
      _
  $region6: #{tpu_custom_call.1} parent=0 // loop_footer
    %s17 = sadd.s32 1, %s13
  $region7: #{tpu_custom_call.1} parent=0 // loop_footer_branch
    %12 = sbr.rel target = $region3
  $region8: #{tpu_custom_call.1} parent=0 // loop_exit
    _

</llo_original>
